<compile_context>
chip_gen: v6e
topology: v6e:2x2x1
jax: 0.10.0
libtpu: 0.0.40
codegen_flags: <defaults>
</compile_context>

<pallas_src>
import jax
import jax.numpy as jnp
from jax import lax
from jax.experimental import pallas as pl
from jax.experimental.pallas import tpu as pltpu

# Module constants (from the PyTorch source)
NOISE_DIMENSION = 10
d = 1
HIDDEN_DIM = 16
OUT_DIM = 1                           # GENERATOR_OUTPUT_IMAGE_SHAPE
INPUT_DIM = NOISE_DIMENSION + 2 * d   # 12


def _round_up(n, m):
    return ((n + m - 1) // m) * m


def _geny_kernel(x_ref, w1t_ref, b1_ref, w2_ref, b2_ref, o_ref):
    # x_ref:   (bt, 12)   w1t_ref: (16, 12)   b1_ref: (16, 1)
    # w2_ref:  (16, 1)    b2_ref:  (1, 1)     o_ref:  (1, bt)
    #
    # First Linear on the MXU, contracting both feature dims so the result is
    # (16, bt): batch lands on the lane axis.
    h = lax.dot_general(
        w1t_ref[...], x_ref[...],
        dimension_numbers=(((1,), (1,)), ((), ())),
        preferred_element_type=jnp.float32,
    )
    h = h + b1_ref[...]                      # (16, 1) broadcast over lanes
    # LeakyReLU(negative_slope=0.1) on the VPU.
    h = jnp.where(h > 0, h, 0.1 * h)
    # Second Linear (16 -> 1): VPU multiply + sublane reduce (keeps the MXU
    # out of a degenerate N=1 matmul) -> lane-dense (1, bt) output.
    o = jnp.sum(h * w2_ref[...], axis=0, keepdims=True) + b2_ref[...]
    o_ref[...] = o.astype(o_ref.dtype)


def geny_dash_xy_forward(x, w1, b1, w2, b2, *, batch_tile=2048):
    """x: (B, 12) float32 -> (B, 1) float32. Any B is supported (padded)."""
    B, F = x.shape
    assert F == INPUT_DIM

    # Lane-dense batch tile: multiple of 128, shrunk for small batches.
    bt = max(128, min(batch_tile, _round_up(B, 128)))
    bt = _round_up(bt, 128)
    B_pad = _round_up(B, bt)
    num_tiles = B_pad // bt

    if B_pad != B:
        x = jnp.pad(x, ((0, B_pad - B), (0, 0)))

    # Parameters reshaped so broadcasting inside the transposed layout is free.
    w1t = jnp.asarray(w1).T.reshape(HIDDEN_DIM, INPUT_DIM)   # (16, 12)
    b1c = jnp.asarray(b1).reshape(HIDDEN_DIM, 1)             # (16, 1)
    w2c = jnp.asarray(w2).reshape(HIDDEN_DIM, OUT_DIM)       # (16, 1)
    b2c = jnp.asarray(b2).reshape(1, OUT_DIM)                # (1, 1)

    out = pl.pallas_call(
        _geny_kernel,
        out_shape=jax.ShapeDtypeStruct((1, B_pad), x.dtype),
        grid_spec=pltpu.PrefetchScalarGridSpec(
            num_scalar_prefetch=0,
            grid=(num_tiles,),
            in_specs=[
                # x is tiled over the batch axis.
                pl.BlockSpec((bt, INPUT_DIM), lambda i: (i, 0)),
                # Parameters: full (tiny) arrays, same block every grid step.
                pl.BlockSpec((HIDDEN_DIM, INPUT_DIM), lambda i: (0, 0)),
                pl.BlockSpec((HIDDEN_DIM, 1), lambda i: (0, 0)),
                pl.BlockSpec((HIDDEN_DIM, OUT_DIM), lambda i: (0, 0)),
                pl.BlockSpec((1, OUT_DIM), lambda i: (0, 0)),
            ],
            # Lane-dense output: batch on the last (lane) axis.
            out_specs=pl.BlockSpec((1, bt), lambda i: (0, i)),
        ),
        compiler_params=pltpu.CompilerParams(
            dimension_semantics=("parallel",),
        ),
    )(x, w1t, b1c, w2c, b2c)

    # (1, B_pad) -> (B, 1); row-major reshape matches the contiguous batch
    # chunks written by each grid step.
    return out.reshape(B_pad, 1)[:B]


def init_params(key):
    """Deterministic parameter init (shapes match nn.Linear(12,16), nn.Linear(16,1))."""
    k1, k2, k3, k4 = jax.random.split(key, 4)
    # PyTorch-style uniform(-1/sqrt(fan_in), 1/sqrt(fan_in))
    lim1 = 1.0 / jnp.sqrt(jnp.float32(INPUT_DIM))
    lim2 = 1.0 / jnp.sqrt(jnp.float32(HIDDEN_DIM))
    w1 = jax.random.uniform(k1, (INPUT_DIM, HIDDEN_DIM), jnp.float32, -lim1, lim1)
    b1 = jax.random.uniform(k2, (HIDDEN_DIM,), jnp.float32, -lim1, lim1)
    w2 = jax.random.uniform(k3, (HIDDEN_DIM, OUT_DIM), jnp.float32, -lim2, lim2)
    b2 = jax.random.uniform(k4, (OUT_DIM,), jnp.float32, -lim2, lim2)
    return w1, b1, w2, b2


def reference_forward(x, w1, b1, w2, b2):
    h = x @ w1 + b1
    h = jnp.where(h > 0, h, 0.1 * h)
    return h @ w2 + b2


if __name__ == "__main__":
    key = jax.random.PRNGKey(0)
    kx, kp = jax.random.split(key)

    # Small batch that is NOT a multiple of the tile -> exercises padding path.
    B = 300
    x = jax.random.normal(kx, (B, INPUT_DIM), jnp.float32)
    w1, b1, w2, b2 = init_params(kp)

    out = geny_dash_xy_forward(x, w1, b1, w2, b2, batch_tile=2048)
    out = jax.block_until_ready(out)

    ref = reference_forward(x, w1, b1, w2, b2)
    assert out.shape == (B, OUT_DIM)
    assert jnp.allclose(out, ref, atol=1e-5, rtol=1e-5)
    print("KERNEL_OK")
</pallas_src>

<mosaic_0001>
module attributes {stable_mosaic.version = 11 : i64} {
  func.func @_geny_kernel(%arg0: i32, %arg1: memref<384x12xf32, #tpu.memory_space<vmem>>, %arg2: memref<16x12xf32, #tpu.memory_space<vmem>>, %arg3: memref<16x1xf32, #tpu.memory_space<vmem>>, %arg4: memref<16x1xf32, #tpu.memory_space<vmem>>, %arg5: memref<1x1xf32, #tpu.memory_space<vmem>>, %arg6: memref<1x384xf32, #tpu.memory_space<vmem>>) attributes {dimension_semantics = [#tpu.dimension_semantics<parallel>], iteration_bounds = array<i64: 1>, scalar_prefetch = 0 : i64, scratch_operands = 0 : i64, tpu.core_type = #tpu.core_type<tc>, window_params = [{transform_indices = @transform_0, window_bounds = array<i64: 384, 12>}, {pipeline_mode = #tpu.pipeline_mode<synchronous>, transform_indices = @transform_1, window_bounds = array<i64: 16, 12>}, {pipeline_mode = #tpu.pipeline_mode<synchronous>, transform_indices = @transform_2, window_bounds = array<i64: 16, 1>}, {pipeline_mode = #tpu.pipeline_mode<synchronous>, transform_indices = @transform_3, window_bounds = array<i64: 16, 1>}, {pipeline_mode = #tpu.pipeline_mode<synchronous>, transform_indices = @transform_4, window_bounds = array<i64: 1, 1>}, {transform_indices = @transform_5, window_bounds = array<i64: 1, 384>}]} {
    %c0 = arith.constant 0 : index
    %c0_0 = arith.constant 0 : index
    %0 = vector.load %arg2[%c0, %c0_0] : memref<16x12xf32, #tpu.memory_space<vmem>>, vector<16x12xf32>
    %c0_1 = arith.constant 0 : index
    %c0_2 = arith.constant 0 : index
    %1 = vector.load %arg1[%c0_1, %c0_2] : memref<384x12xf32, #tpu.memory_space<vmem>>, vector<384x12xf32>
    %cst = arith.constant dense<0.000000e+00> : vector<16x384xf32>
    %2 = tpu.matmul %0, %1, %cst {dimension_numbers = #tpu.dot_dimension_numbers<[1], [1], [0], [0], [0, 0, 1, 0], [], []>} : vector<16x12xf32>, vector<384x12xf32>, vector<16x384xf32> -> vector<16x384xf32>
    %c0_3 = arith.constant 0 : index
    %c0_4 = arith.constant 0 : index
    %3 = vector.load %arg3[%c0_3, %c0_4] : memref<16x1xf32, #tpu.memory_space<vmem>>, vector<16x1xf32>
    %4 = vector.broadcast %3 : vector<16x1xf32> to vector<16x384xf32>
    %5 = arith.addf %2, %4 : vector<16x384xf32>
    %cst_5 = arith.constant 0.000000e+00 : f32
    %6 = vector.broadcast %cst_5 : f32 to vector<16x384xf32>
    %7 = arith.cmpf ogt, %5, %6 : vector<16x384xf32>
    %cst_6 = arith.constant 1.000000e-01 : f32
    %8 = vector.broadcast %cst_6 : f32 to vector<16x384xf32>
    %9 = arith.mulf %8, %5 : vector<16x384xf32>
    %10 = arith.select %7, %5, %9 : vector<16x384xi1>, vector<16x384xf32>
    %c0_7 = arith.constant 0 : index
    %c0_8 = arith.constant 0 : index
    %11 = vector.load %arg4[%c0_7, %c0_8] : memref<16x1xf32, #tpu.memory_space<vmem>>, vector<16x1xf32>
    %12 = vector.broadcast %11 : vector<16x1xf32> to vector<16x384xf32>
    %13 = arith.mulf %10, %12 : vector<16x384xf32>
    %cst_9 = arith.constant dense<0.000000e+00> : vector<384xf32>
    %14 = vector.multi_reduction <add>, %13, %cst_9 [0] : vector<16x384xf32> to vector<384xf32>
    %15 = vector.shape_cast %14 : vector<384xf32> to vector<1x384xf32>
    %c0_10 = arith.constant 0 : index
    %c0_11 = arith.constant 0 : index
    %16 = vector.load %arg5[%c0_10, %c0_11] : memref<1x1xf32, #tpu.memory_space<vmem>>, vector<1x1xf32>
    %17 = vector.broadcast %16 : vector<1x1xf32> to vector<1x384xf32>
    %18 = arith.addf %15, %17 : vector<1x384xf32>
    %c0_12 = arith.constant 0 : index
    %c0_13 = arith.constant 0 : index
    %19 = vector.load %arg6[%c0_12, %c0_13] : memref<1x384xf32, #tpu.memory_space<vmem>>, vector<1x384xf32>
    tpu.vector_store %arg6[%c0_12, %c0_13], %18 {strides = array<i32>} : memref<1x384xf32, #tpu.memory_space<vmem>>, vector<1x384xf32>,
    return
  }
  func.func @transform_0(%arg0: i32) -> (i32, i32) {
    %c0_i32 = arith.constant 0 : i32
    %c0_i32_0 = arith.constant 0 : i32
    return %arg0, %c0_i32 : i32, i32
  }
  func.func @transform_1(%arg0: i32) -> (i32, i32) {
    %c0_i32 = arith.constant 0 : i32
    %c0_i32_0 = arith.constant 0 : i32
    %c0_i32_1 = arith.constant 0 : i32
    return %c0_i32, %c0_i32_0 : i32, i32
  }
  func.func @transform_2(%arg0: i32) -> (i32, i32) {
    %c0_i32 = arith.constant 0 : i32
    %c0_i32_0 = arith.constant 0 : i32
    %c0_i32_1 = arith.constant 0 : i32
    return %c0_i32, %c0_i32_0 : i32, i32
  }
  func.func @transform_3(%arg0: i32) -> (i32, i32) {
    %c0_i32 = arith.constant 0 : i32
    %c0_i32_0 = arith.constant 0 : i32
    %c0_i32_1 = arith.constant 0 : i32
    return %c0_i32, %c0_i32_0 : i32, i32
  }
  func.func @transform_4(%arg0: i32) -> (i32, i32) {
    %c0_i32 = arith.constant 0 : i32
    %c0_i32_0 = arith.constant 0 : i32
    %c0_i32_1 = arith.constant 0 : i32
    return %c0_i32, %c0_i32_0 : i32, i32
  }
  func.func @transform_5(%arg0: i32) -> (i32, i32) {
    %c0_i32 = arith.constant 0 : i32
    %c0_i32_0 = arith.constant 0 : i32
    return %c0_i32, %arg0 : i32, i32
  }
}

</mosaic_0001>

<llo_original>
// kernel: tpu_custom_call.1
$region0: #{tpu_custom_call.1}
  #allocation0 [shape = 'u32[]', space=smem, size = 0x4, offset = 0x4, fixed_abs, tag = 'smem constant byte address 0x4 - core index']
  #allocation1 [shape = 'u32[144,128]{1,0:T(1,128)}', space=vmem, size = 0x12000, scoped, tag = 'internal scratch']
  #allocation2 [shape = 'f32[1,1]{1,0:T(1,128)S(1)}', space=vmem, size = 0x200, scoped, tag = 'scoped memory for tpu_custom_call.1']
  %s0 = inlined_call_operand.vmem [shape: f32[384,12], index: 0, kind: input, shape index: {}]
  %s1 = inlined_call_operand.vmem [shape: f32[16,12], index: 1, kind: input, shape index: {}]
  %s2 = inlined_call_operand.vmem [shape: f32[16,1], index: 2, kind: input, shape index: {}]
  %s3 = inlined_call_operand.vmem [shape: f32[16,1], index: 3, kind: input, shape index: {}]
  %s4 = inlined_call_operand.<no memory space> [shape: f32[1,1], index: 4, kind: input, shape index: {}]
  %s5 = inlined_call_operand.hbm [shape: f32[1,384], index: 5, kind: output, shape index: {}]
  %s6 = sld [smem:[#allocation0]]
  $region30: #{tpu_custom_call.1} parent=0
    _
  %s8 = ssub.s32 1, %s6
  %s9 = scalar_select 0, %s8, %s6
  %v10 = vstv %s4
  %11 = vst [vmem:[#allocation2] sm:$0x1] %v10
  $region1: #{tpu_custom_call.1} parent=0
    #allocation3 [shape = 'u8[1536]{0}', space=vmem, size = 0x800, scoped, tag = 'output window, operand 0, single buffered']
    #allocation4 [shape = 's32[1]{0}', space=sflag, size = 0x4, scoped, tag = 'scoped memory for tpu_custom_call.1']
    %12 = vsyncpa [#allocation4], 0
    // Predicated region
    $region2: #{tpu_custom_call.1} parent=1 // pred_check
      _
    $region3: #{tpu_custom_call.1} parent=1 // pred_check_branch
      %14 = sbr.rel (0) target = $region5
    $region4: #{tpu_custom_call.1} parent=1 // pred_region
      _
    $region5: #{tpu_custom_call.1} parent=1 // pred_fallthru
      _
    // Predicated region
    $region6: #{tpu_custom_call.1} parent=1 // pred_check
      _
    $region7: #{tpu_custom_call.1} parent=1 // pred_check_branch
      %16 = sbr.rel (0) target = $region9
    $region8: #{tpu_custom_call.1} parent=1 // pred_region
      _
    $region9: #{tpu_custom_call.1} parent=1 // pred_fallthru
      _
    // Predicated region
    $region10: #{tpu_custom_call.1} parent=1 // pred_check
      _
    $region11: #{tpu_custom_call.1} parent=1 // pred_check_branch
      %18 = sbr.rel (0) target = $region13
    $region12: #{tpu_custom_call.1} parent=1 // pred_region
      _
    $region13: #{tpu_custom_call.1} parent=1 // pred_fallthru
      _
    // Predicated region
    $region14: #{tpu_custom_call.1} parent=1 // pred_check
      _
    $region15: #{tpu_custom_call.1} parent=1 // pred_check_branch
      %20 = sbr.rel (0) target = $region17
    $region16: #{tpu_custom_call.1} parent=1 // pred_region
      _
    $region17: #{tpu_custom_call.1} parent=1 // pred_fallthru
      _
    // Predicated region
    $region18: #{tpu_custom_call.1} parent=1 // pred_check
      _
    $region19: #{tpu_custom_call.1} parent=1 // pred_check_branch
      %22 = sbr.rel (0) target = $region21
    $region20: #{tpu_custom_call.1} parent=1 // pred_region
      _
    $region21: #{tpu_custom_call.1} parent=1 // pred_fallthru
      _
    %v23 = vld [vmem:[%s1] sm:$0xff]
    %v24 = vld [vmem:[%s1 + $0x8] sm:$0xff]
    %v25 = vld [vmem:[%s0] sm:$0xff]
    %v26 = vld [vmem:[%s0 + $0x8] sm:$0xff]
    %v27 = vld [vmem:[%s0 + $0x10] sm:$0xff]
    %v28 = vld [vmem:[%s0 + $0x18] sm:$0xff]
    %v29 = vld [vmem:[%s0 + $0x20] sm:$0xff]
    %v30 = vld [vmem:[%s0 + $0x28] sm:$0xff]
    %v31 = vld [vmem:[%s0 + $0x30] sm:$0xff]
    %v32 = vld [vmem:[%s0 + $0x38] sm:$0xff]
    %v33 = vld [vmem:[%s0 + $0x40] sm:$0xff]
    %v34 = vld [vmem:[%s0 + $0x48] sm:$0xff]
    %v35 = vld [vmem:[%s0 + $0x50] sm:$0xff]
    %v36 = vld [vmem:[%s0 + $0x58] sm:$0xff]
    %v37 = vld [vmem:[%s0 + $0x60] sm:$0xff]
    %v38 = vld [vmem:[%s0 + $0x68] sm:$0xff]
    %v39 = vld [vmem:[%s0 + $0x70] sm:$0xff]
    %v40 = vld [vmem:[%s0 + $0x78] sm:$0xff]
    %v41 = vld [vmem:[%s0 + $0x80] sm:$0xff]
    %v42 = vld [vmem:[%s0 + $0x88] sm:$0xff]
    %v43 = vld [vmem:[%s0 + $0x90] sm:$0xff]
    %v44 = vld [vmem:[%s0 + $0x98] sm:$0xff]
    %v45 = vld [vmem:[%s0 + $0xa0] sm:$0xff]
    %v46 = vld [vmem:[%s0 + $0xa8] sm:$0xff]
    %v47 = vld [vmem:[%s0 + $0xb0] sm:$0xff]
    %v48 = vld [vmem:[%s0 + $0xb8] sm:$0xff]
    %v49 = vld [vmem:[%s0 + $0xc0] sm:$0xff]
    %v50 = vld [vmem:[%s0 + $0xc8] sm:$0xff]
    %v51 = vld [vmem:[%s0 + $0xd0] sm:$0xff]
    %v52 = vld [vmem:[%s0 + $0xd8] sm:$0xff]
    %v53 = vld [vmem:[%s0 + $0xe0] sm:$0xff]
    %v54 = vld [vmem:[%s0 + $0xe8] sm:$0xff]
    %v55 = vld [vmem:[%s0 + $0xf0] sm:$0xff]
    %v56 = vld [vmem:[%s0 + $0xf8] sm:$0xff]
    %v57 = vld [vmem:[%s0 + $0x100] sm:$0xff]
    %v58 = vld [vmem:[%s0 + $0x108] sm:$0xff]
    %v59 = vld [vmem:[%s0 + $0x110] sm:$0xff]
    %v60 = vld [vmem:[%s0 + $0x118] sm:$0xff]
    %v61 = vld [vmem:[%s0 + $0x120] sm:$0xff]
    %v62 = vld [vmem:[%s0 + $0x128] sm:$0xff]
    %v63 = vld [vmem:[%s0 + $0x130] sm:$0xff]
    %v64 = vld [vmem:[%s0 + $0x138] sm:$0xff]
    %v65 = vld [vmem:[%s0 + $0x140] sm:$0xff]
    %v66 = vld [vmem:[%s0 + $0x148] sm:$0xff]
    %v67 = vld [vmem:[%s0 + $0x150] sm:$0xff]
    %v68 = vld [vmem:[%s0 + $0x158] sm:$0xff]
    %v69 = vld [vmem:[%s0 + $0x160] sm:$0xff]
    %v70 = vld [vmem:[%s0 + $0x168] sm:$0xff]
    %v71 = vld [vmem:[%s0 + $0x170] sm:$0xff]
    %v72 = vld [vmem:[%s0 + $0x178] sm:$0xff]
    %v73 = vld [vmem:[%s2] sm:$0xff]
    %v74 = vld [vmem:[%s2 + $0x8] sm:$0xff]
    %76 = vset.pattern.permute.xlu0 0
    %77 = vperm.xlu0 %76, %v73
    %v78 = vpop.permute.xlu0 %77
    %81 = vset.pattern.permute.xlu0 0
    %82 = vperm.xlu0 %81, %v74
    %v83 = vpop.permute.xlu0 %82
    %vm85 = vcmask 97280
    %v87 = vsel %vm85, %v23, 0
    %v90 = vsel %vm85, %v24, 0
    %v93 = vsel %vm85, %v25, 0
    %v96 = vsel %vm85, %v26, 0
    %v99 = vsel %vm85, %v27, 0
    %v102 = vsel %vm85, %v28, 0
    %v105 = vsel %vm85, %v29, 0
    %v108 = vsel %vm85, %v30, 0
    %v111 = vsel %vm85, %v31, 0
    %v114 = vsel %vm85, %v32, 0
    %v117 = vsel %vm85, %v33, 0
    %v120 = vsel %vm85, %v34, 0
    %v123 = vsel %vm85, %v35, 0
    %v126 = vsel %vm85, %v36, 0
    %v129 = vsel %vm85, %v37, 0
    %v132 = vsel %vm85, %v38, 0
    %v135 = vsel %vm85, %v39, 0
    %v138 = vsel %vm85, %v40, 0
    %v141 = vsel %vm85, %v41, 0
    %v144 = vsel %vm85, %v42, 0
    %v147 = vsel %vm85, %v43, 0
    %v150 = vsel %vm85, %v44, 0
    %v153 = vsel %vm85, %v45, 0
    %v156 = vsel %vm85, %v46, 0
    %v159 = vsel %vm85, %v47, 0
    %v162 = vsel %vm85, %v48, 0
    %v165 = vsel %vm85, %v49, 0
    %v168 = vsel %vm85, %v50, 0
    %v171 = vsel %vm85, %v51, 0
    %v174 = vsel %vm85, %v52, 0
    %v177 = vsel %vm85, %v53, 0
    %v180 = vsel %vm85, %v54, 0
    %v183 = vsel %vm85, %v55, 0
    %v186 = vsel %vm85, %v56, 0
    %v189 = vsel %vm85, %v57, 0
    %v192 = vsel %vm85, %v58, 0
    %v195 = vsel %vm85, %v59, 0
    %v198 = vsel %vm85, %v60, 0
    %v201 = vsel %vm85, %v61, 0
    %v204 = vsel %vm85, %v62, 0
    %v207 = vsel %vm85, %v63, 0
    %v210 = vsel %vm85, %v64, 0
    %v213 = vsel %vm85, %v65, 0
    %v216 = vsel %vm85, %v66, 0
    %v219 = vsel %vm85, %v67, 0
    %v222 = vsel %vm85, %v68, 0
    %v225 = vsel %vm85, %v69, 0
    %v228 = vsel %vm85, %v70, 0
    %v231 = vsel %vm85, %v71, 0
    %v234 = vsel %vm85, %v72, 0
    %236 = vmatprep.subr.mxu0 0.0
    %237 = vmatpush1.xpose.msra.mxu0 %v138
    %238 = vmatprep.subr.mxu0 0.0
    %239 = vmatpush1.xpose.msra.mxu0 %v135
    %240 = vmatprep.subr.mxu0 0.0
    %241 = vmatpush1.xpose.msra.mxu0 %v132
    %242 = vmatprep.subr.mxu0 0.0
    %243 = vmatpush1.xpose.msra.mxu0 %v129
    %244 = vmatprep.subr.mxu0 0.0
    %245 = vmatpush1.xpose.msra.mxu0 %v126
    %246 = vmatprep.subr.mxu0 0.0
    %247 = vmatpush1.xpose.msra.mxu0 %v123
    %248 = vmatprep.subr.mxu0 0.0
    %249 = vmatpush1.xpose.msra.mxu0 %v120
    %250 = vmatprep.subr.mxu0 0.0
    %251 = vmatpush1.xpose.msra.mxu0 %v117
    %252 = vmatprep.subr.mxu0 0.0
    %253 = vmatpush1.xpose.msra.mxu0 %v114
    %254 = vmatprep.subr.mxu0 0.0
    %255 = vmatpush1.xpose.msra.mxu0 %v111
    %256 = vmatprep.subr.mxu0 0.0
    %257 = vmatpush1.xpose.msra.mxu0 %v108
    %258 = vmatprep.subr.mxu0 0.0
    %259 = vmatpush1.xpose.msra.mxu0 %v105
    %260 = vmatprep.subr.mxu0 0.0
    %261 = vmatpush1.xpose.msra.mxu0 %v102
    %262 = vmatprep.subr.mxu0 0.0
    %263 = vmatpush1.xpose.msra.mxu0 %v99
    %264 = vmatprep.subr.mxu0 0.0
    %265 = vmatpush1.xpose.msra.mxu0 %v96
    %266 = vmatprep.subr.mxu0 0.0
    %267 = vmatpush1.xpose.msra.mxu0 %v93
    %268 = vmatprep.subr.mxu0 0.0
    %269 = vmatpush2.xpose.msra.mxu0 %v186
    %270 = vmatprep.subr.mxu0 0.0
    %271 = vmatpush2.xpose.msra.mxu0 %v183
    %272 = vmatprep.subr.mxu0 0.0
    %273 = vmatpush2.xpose.msra.mxu0 %v180
    %274 = vmatprep.subr.mxu0 0.0
    %275 = vmatpush2.xpose.msra.mxu0 %v177
    %276 = vmatprep.subr.mxu0 0.0
    %277 = vmatpush2.xpose.msra.mxu0 %v174
    %278 = vmatprep.subr.mxu0 0.0
    %279 = vmatpush2.xpose.msra.mxu0 %v171
    %280 = vmatprep.subr.mxu0 0.0
    %281 = vmatpush2.xpose.msra.mxu0 %v168
    %282 = vmatprep.subr.mxu0 0.0
    %283 = vmatpush2.xpose.msra.mxu0 %v165
    %284 = vmatprep.subr.mxu0 0.0
    %285 = vmatpush2.xpose.msra.mxu0 %v162
    %286 = vmatprep.subr.mxu0 0.0
    %287 = vmatpush2.xpose.msra.mxu0 %v159
    %288 = vmatprep.subr.mxu0 0.0
    %289 = vmatpush2.xpose.msra.mxu0 %v156
    %290 = vmatprep.subr.mxu0 0.0
    %291 = vmatpush2.xpose.msra.mxu0 %v153
    %292 = vmatprep.subr.mxu0 0.0
    %293 = vmatpush2.xpose.msra.mxu0 %v150
    %294 = vmatprep.subr.mxu0 0.0
    %295 = vmatpush2.xpose.msra.mxu0 %v147
    %296 = vmatprep.subr.mxu0 0.0
    %297 = vmatpush2.xpose.msra.mxu0 %v144
    %298 = vmatprep.subr.mxu0 0.0
    %299 = vmatpush2.xpose.msra.mxu0 %v141
    %300 = vmatprep.mubr.f32.mxu0 0.0
    %301 = vmatmul.mubr.f32.gmra.mxu0 %v87
    %v302 = vpop.f32.mrf.mxu0
    %v303 = vadd.f32 %v78, %v302
    %v304 = vpop.f32.mrf.mxu0
    %v305 = vadd.f32 %v78, %v304
    %306 = vmatprep.mubr.f32.mxu0 0.0
    %307 = vmatmul.mubr.f32.gmra.mxu0 %v90
    %v308 = vpop.f32.mrf.mxu0
    %v309 = vadd.f32 %v83, %v308
    %v310 = vpop.f32.mrf.mxu0
    %v311 = vadd.f32 %v83, %v310
    %312 = vdwg.mxu0
    %313 = vmatprep.subr.mxu0 0.0
    %314 = vmatpush1.xpose.msra.mxu0 %v234
    %315 = vmatprep.subr.mxu0 0.0
    %316 = vmatpush1.xpose.msra.mxu0 %v231
    %317 = vmatprep.subr.mxu0 0.0
    %318 = vmatpush1.xpose.msra.mxu0 %v228
    %319 = vmatprep.subr.mxu0 0.0
    %320 = vmatpush1.xpose.msra.mxu0 %v225
    %321 = vmatprep.subr.mxu0 0.0
    %322 = vmatpush1.xpose.msra.mxu0 %v222
    %323 = vmatprep.subr.mxu0 0.0
    %324 = vmatpush1.xpose.msra.mxu0 %v219
    %325 = vmatprep.subr.mxu0 0.0
    %326 = vmatpush1.xpose.msra.mxu0 %v216
    %327 = vmatprep.subr.mxu0 0.0
    %328 = vmatpush1.xpose.msra.mxu0 %v213
    %329 = vmatprep.subr.mxu0 0.0
    %330 = vmatpush1.xpose.msra.mxu0 %v210
    %331 = vmatprep.subr.mxu0 0.0
    %332 = vmatpush1.xpose.msra.mxu0 %v207
    %333 = vmatprep.subr.mxu0 0.0
    %334 = vmatpush1.xpose.msra.mxu0 %v204
    %335 = vmatprep.subr.mxu0 0.0
    %336 = vmatpush1.xpose.msra.mxu0 %v201
    %337 = vmatprep.subr.mxu0 0.0
    %338 = vmatpush1.xpose.msra.mxu0 %v198
    %339 = vmatprep.subr.mxu0 0.0
    %340 = vmatpush1.xpose.msra.mxu0 %v195
    %341 = vmatprep.subr.mxu0 0.0
    %342 = vmatpush1.xpose.msra.mxu0 %v192
    %343 = vmatprep.subr.mxu0 0.0
    %344 = vmatpush1.xpose.msra.mxu0 %v189
    %345 = vmatprep.subr.mxu0 0.0
    %346 = vmatpush2.xpose.msra.mxu0 0.0
    %347 = vmatprep.subr.mxu0 0.0
    %348 = vmatpush2.xpose.msra.mxu0 0.0
    %349 = vmatprep.subr.mxu0 0.0
    %350 = vmatpush2.xpose.msra.mxu0 0.0
    %351 = vmatprep.subr.mxu0 0.0
    %352 = vmatpush2.xpose.msra.mxu0 0.0
    %353 = vmatprep.subr.mxu0 0.0
    %354 = vmatpush2.xpose.msra.mxu0 0.0
    %355 = vmatprep.subr.mxu0 0.0
    %356 = vmatpush2.xpose.msra.mxu0 0.0
    %357 = vmatprep.subr.mxu0 0.0
    %358 = vmatpush2.xpose.msra.mxu0 0.0
    %359 = vmatprep.subr.mxu0 0.0
    %360 = vmatpush2.xpose.msra.mxu0 0.0
    %361 = vmatprep.subr.mxu0 0.0
    %362 = vmatpush2.xpose.msra.mxu0 0.0
    %363 = vmatprep.subr.mxu0 0.0
    %364 = vmatpush2.xpose.msra.mxu0 0.0
    %365 = vmatprep.subr.mxu0 0.0
    %366 = vmatpush2.xpose.msra.mxu0 0.0
    %367 = vmatprep.subr.mxu0 0.0
    %368 = vmatpush2.xpose.msra.mxu0 0.0
    %369 = vmatprep.subr.mxu0 0.0
    %370 = vmatpush2.xpose.msra.mxu0 0.0
    %371 = vmatprep.subr.mxu0 0.0
    %372 = vmatpush2.xpose.msra.mxu0 0.0
    %373 = vmatprep.subr.mxu0 0.0
    %374 = vmatpush2.xpose.msra.mxu0 0.0
    %375 = vmatprep.subr.mxu0 0.0
    %376 = vmatpush2.xpose.msra.mxu0 0.0
    %377 = vmatprep.mubr.f32.mxu0 0.0
    %378 = vmatmul.mubr.f32.gmra.mxu0 %v87
    %v379 = vpop.f32.mrf.mxu0
    %v380 = vadd.f32 %v78, %v379
    %v381 = vpop.f32.mrf.mxu0
    %382 = vmatprep.mubr.f32.mxu0 0.0
    %383 = vmatmul.mubr.f32.gmra.mxu0 %v90
    %v384 = vpop.f32.mrf.mxu0
    %v385 = vadd.f32 %v83, %v384
    %v386 = vpop.f32.mrf.mxu0
    %387 = vdwg.mxu0
    %vm388 = vcmp.gt.f32.partialorder %v303, 0.0
    %vm389 = vcmp.gt.f32.partialorder %v305, 0.0
    %vm390 = vcmp.gt.f32.partialorder %v380, 0.0
    %vm391 = vcmp.gt.f32.partialorder %v309, 0.0
    %vm392 = vcmp.gt.f32.partialorder %v311, 0.0
    %vm393 = vcmp.gt.f32.partialorder %v385, 0.0
    %v394 = vmul.f32 %v303, 0.1
    %v395 = vmul.f32 %v305, 0.1
    %v396 = vmul.f32 %v380, 0.1
    %v397 = vmul.f32 %v309, 0.1
    %v398 = vmul.f32 %v311, 0.1
    %v399 = vmul.f32 %v385, 0.1
    %v400 = vsel %vm388, %v303, %v394
    %v401 = vsel %vm389, %v305, %v395
    %v402 = vsel %vm390, %v380, %v396
    %v403 = vsel %vm391, %v309, %v397
    %v404 = vsel %vm392, %v311, %v398
    %v405 = vsel %vm393, %v385, %v399
    %v406 = vld [vmem:[%s3] sm:$0xff]
    %v407 = vld [vmem:[%s3 + $0x8] sm:$0xff]
    %409 = vset.pattern.permute.xlu0 0
    %410 = vperm.xlu0 %409, %v406
    %v411 = vpop.permute.xlu0 %410
    %414 = vset.pattern.permute.xlu0 0
    %415 = vperm.xlu0 %414, %v407
    %v416 = vpop.permute.xlu0 %415
    %v418 = vmul.f32 %v400, %v411
    %v419 = vmul.f32 %v401, %v411
    %v420 = vmul.f32 %v402, %v411
    %v421 = vmul.f32 %v403, %v416
    %v422 = vmul.f32 %v404, %v416
    %v423 = vmul.f32 %v405, %v416
    %v424 = vadd.f32 %v418, %v421
    %v425 = vrot.slane %v424, 4
    %v426 = vadd.f32 %v424, %v425
    %v427 = vrot.slane %v426, 2
    %v428 = vadd.f32 %v426, %v427
    %v429 = vrot.slane %v428, 1
    %v430 = vadd.f32 %v428, %v429
    %v431 = vadd.f32 %v419, %v422
    %v432 = vrot.slane %v431, 4
    %v433 = vadd.f32 %v431, %v432
    %v434 = vrot.slane %v433, 2
    %v435 = vadd.f32 %v433, %v434
    %v436 = vrot.slane %v435, 1
    %v437 = vadd.f32 %v435, %v436
    %v438 = vadd.f32 %v420, %v423
    %v439 = vrot.slane %v438, 4
    %v440 = vadd.f32 %v438, %v439
    %v441 = vrot.slane %v440, 2
    %v442 = vadd.f32 %v440, %v441
    %v443 = vrot.slane %v442, 1
    %v444 = vadd.f32 %v442, %v443
    %v445 = vld [vmem:[#allocation2] sm:$0x1]
    %447 = vset.pattern.permute.xlu0 0
    %448 = vperm.xlu0 %447, %v445
    %v449 = vpop.permute.xlu0 %448
    %v451 = vlaneseq
    %v452 = vshrl.u32 %v451, 7
    %v453 = vsub.s32 0, %v452
    %v454 = vrot.slane %v449, %v453
    %v455 = vadd.f32 %v430, %v454
    %v456 = vadd.f32 %v437, %v454
    %v457 = vadd.f32 %v444, %v454
    %v461 = vcombine.low %v455, %v456
    %v463 = vunpack.c.l.s4 1966171168
    %v464 = vunpack.c.0.s8 %v463
    %v465 = vlaneseq
    %v466 = vshrl.u32 %v465, 7
    %v467 = vsub.s32 %v464, %v466
    %v468 = vrot.slane %v461, %v467
    %v470 = vunpack.c.l.s4 1966171168
    %v471 = vunpack.c.0.s8 %v470
    %v472 = vlaneseq
    %v473 = vshrl.u32 %v472, 7
    %v474 = vsub.s32 %v471, %v473
    %v475 = vrot.slane %v457, %v474
    %v476 = vcombine.low %v468, %v475
    %v478 = vunpack.c.l.s4 1966171168
    %v479 = vunpack.c.0.s8 %v478
    %v480 = vlaneseq
    %v481 = vshrl.u32 %v480, 7
    %v482 = vsub.s32 %v479, %v481
    %v483 = vrot.slane %v476, %v482
    %v485 = vlaneseq
    %vm486 = vcmp.ge.s32.totalorder %v485, 0
    %vm487 = vcmp.lt.s32.totalorder %v485, 384
    %vm488 = vmand %vm486, %vm487
    %489 = vst.msk [vmem:[#allocation3] sm:$0x7] %vm488, %v483
    // Predicated region
    $region22: #{tpu_custom_call.1} parent=1 // pred_check
      _
    $region23: #{tpu_custom_call.1} parent=1 // pred_check_branch
      %491 = sbr.rel (0) target = $region25
    $region24: #{tpu_custom_call.1} parent=1 // pred_region
      %s493 = ssub.s32 48, 48
      %494 = vsyncadd [#allocation4], %s493
      %s496 = sshll.u32 [#allocation3], 4
      %s497 = int_to_ptr.vmem [resolvable:$true] %s496
      %499 = dma.vmem_to_hbm [thread:$0]  %s497, 48, %s5, [#allocation4]
    $region25: #{tpu_custom_call.1} parent=1 // pred_fallthru
      _
    // Predicated region
    $region26: #{tpu_custom_call.1} parent=1 // pred_check
      _
    $region27: #{tpu_custom_call.1} parent=1 // pred_check_branch
      %501 = sbr.rel (0) target = $region29
    $region28: #{tpu_custom_call.1} parent=1 // pred_region
      %502 = dma.done [#allocation4], 48
    $region29: #{tpu_custom_call.1} parent=1 // pred_fallthru
      _
    %503 = vsyncpa [#allocation4], 1

</llo_original>
